<compile_context>
chip_gen: v5e
topology: v5e:2x2
jax: 0.10.0
libtpu: 0.0.40
codegen_flags: <defaults>
</compile_context>

<pallas_src>
import functools

import jax
import jax.numpy as jnp
from jax.experimental import pallas as pl
from jax.experimental.pallas import tpu as pltpu

_LANE = 128


def _vmem_budgets():
    """(tile_budget_bytes, scoped_vmem_limit_bytes), per TPU generation."""
    cap = 64 * 1024 * 1024
    try:
        info = pltpu.get_tpu_info()
        cap = int(getattr(info, "vmem_capacity_bytes", cap) or cap)
    except Exception:
        pass  # conservative default (treat as 64 MiB / v7x-like)
    if cap >= 96 * 1024 * 1024:
        # v5e / v6e: 128 MiB physical VMEM.
        return 64 * 1024 * 1024, 96 * 1024 * 1024
    # v7x: 64 MiB per TensorCore.
    return 32 * 1024 * 1024, 48 * 1024 * 1024


def _layernorm_kernel(x_ref, a_ref, b_ref, o_ref, *, eps, features, masked):
    # x_ref: (tile_rows, features_padded); a_ref/b_ref: (1, features_padded).
    x = x_ref[...].astype(jnp.float32)

    if masked:
        col = jax.lax.broadcasted_iota(jnp.int32, x.shape, 1)
        valid = col < features
        x_sum_src = jnp.where(valid, x, 0.0)
    else:
        x_sum_src = x

    # Mean over the *real* feature count only.
    mean = jnp.sum(x_sum_src, axis=-1, keepdims=True) * jnp.float32(1.0 / features)
    centered = x - mean

    # Unbiased variance (divide by N-1), masking out padded lanes.
    c_sq_src = jnp.where(valid, centered, 0.0) if masked else centered
    var = jnp.sum(c_sq_src * c_sq_src, axis=-1, keepdims=True) / jnp.float32(
        features - 1
    )  # features == 1 -> 0/0 -> NaN, matching torch.std unbiased behaviour.
    std = jnp.sqrt(var)

    # Per-row reciprocal, broadcast multiply (cheap VPU path; <=1 ulp vs divide).
    inv = 1.0 / (std + eps)

    a = a_ref[...].astype(jnp.float32)  # (1, features_padded), broadcasts over rows
    b = b_ref[...].astype(jnp.float32)

    o_ref[...] = (a * (centered * inv) + b).astype(o_ref.dtype)


def _pick_tile_rows(rows, features_padded, dtype, budget_bytes):
    """Row-tile size: as large as the VMEM budget allows (cap 4096), rounded to
    the dtype's sublane packing, while keeping >= ~8 grid blocks so the DMA
    pipeline overlaps and v7x can shard rows across both TensorCores."""
    itemsize = jnp.dtype(dtype).itemsize
    sublane = max(8, 32 // itemsize)  # 8 f32, 16 bf16, 32 int8/fp8
    # double-buffered in + out blocks plus ~3 tile-sized f32 temporaries
    bytes_per_row = features_padded * (4 * itemsize + 3 * 4)
    t = budget_bytes // max(bytes_per_row, 1)
    t = min(int(t), 4096)
    min_blocks = 8
    t = min(t, pl.cdiv(rows, min_blocks))
    t = max(sublane, (t // sublane) * sublane)
    if t >= rows:
        # rows too small to split into sublane-aligned blocks: one full block.
        return rows
    return t


def layer_norm(x, a_2, b_2, eps=1e-6, *, tile_rows=None):
    """x: (..., features). a_2, b_2: (features,)."""
    orig_shape = x.shape
    features = orig_shape[-1]
    x2d = x.reshape(-1, features)
    rows = x2d.shape[0]

    # Lane-dense feature axis: pad to a multiple of 128 so stores are unmasked.
    # TODO(synk): in production keep the padded layout end-to-end instead of
    # paying the pad/slice HBM pass at this boundary.
    features_p = ((features + _LANE - 1) // _LANE) * _LANE
    masked = features_p != features
    if masked:
        pad = features_p - features
        x2d = jnp.pad(x2d, ((0, 0), (0, pad)))
        a2d = jnp.pad(a_2.reshape(1, features), ((0, 0), (0, pad)), constant_values=1)
        b2d = jnp.pad(b_2.reshape(1, features), ((0, 0), (0, pad)))
    else:
        a2d = a_2.reshape(1, features)
        b2d = b_2.reshape(1, features)

    budget_bytes, vmem_limit_bytes = _vmem_budgets()
    if tile_rows is None:
        tile_rows = _pick_tile_rows(rows, features_p, x.dtype, budget_bytes)
    tile_rows = min(tile_rows, rows)

    # No host-side row padding: Pallas clips the boundary block; rows are
    # independent so the garbage tail of a partial last block never affects
    # valid output rows.
    grid = (pl.cdiv(rows, tile_rows),)

    out = pl.pallas_call(
        functools.partial(
            _layernorm_kernel, eps=eps, features=features, masked=masked
        ),
        out_shape=jax.ShapeDtypeStruct((rows, features_p), x.dtype),
        grid_spec=pltpu.PrefetchScalarGridSpec(
            num_scalar_prefetch=0,
            grid=grid,
            in_specs=[
                pl.BlockSpec((tile_rows, features_p), lambda i: (i, 0)),
                pl.BlockSpec((1, features_p), lambda i: (0, 0)),
                pl.BlockSpec((1, features_p), lambda i: (0, 0)),
            ],
            out_specs=pl.BlockSpec((tile_rows, features_p), lambda i: (i, 0)),
        ),
        compiler_params=pltpu.CompilerParams(
            dimension_semantics=("parallel",),
            vmem_limit_bytes=vmem_limit_bytes,
        ),
    )(x2d, a2d, b2d)

    if masked:
        out = out[:, :features]
    return out.reshape(orig_shape)


if __name__ == "__main__":
    key = jax.random.PRNGKey(0)
    batch, seq, hidden = 2, 8, 32

    x = jax.random.normal(key, (batch, seq, hidden), dtype=jnp.float32)

    # Deterministic params matching nn.Parameter(torch.ones/zeros(features)).
    a_2 = jnp.ones((hidden,), dtype=jnp.float32)
    b_2 = jnp.zeros((hidden,), dtype=jnp.float32)

    def ref_ln(xx, a, b, eps=1e-6):
        mean = jnp.mean(xx, axis=-1, keepdims=True)
        std = jnp.std(xx, axis=-1, keepdims=True, ddof=1)  # unbiased, like torch
        return a * (xx - mean) / (std + eps) + b

    out = layer_norm(x, a_2, b_2, eps=1e-6)
    jax.block_until_ready(out)
    assert jnp.allclose(out, ref_ln(x, a_2, b_2), atol=1e-5, rtol=1e-5), (
        "mismatch vs reference"
    )

    # rows = 3*7 = 21 is not a multiple of tile_rows -> exercises the clipped
    # partial last grid block (locks in the "garbage tail rows are discarded"
    # behaviour called out in the review).
    x2 = jax.random.normal(jax.random.PRNGKey(1), (3, 7, hidden), dtype=jnp.float32)
    out2 = layer_norm(x2, a_2, b_2, eps=1e-6)
    jax.block_until_ready(out2)
    assert jnp.allclose(out2, ref_ln(x2, a_2, b_2), atol=1e-5, rtol=1e-5), (
        "mismatch vs reference (partial block)"
    )

    print("KERNEL_OK")
</pallas_src>

<mosaic_0001>
module attributes {stable_mosaic.version = 11 : i64} {
  func.func @_layernorm_kernel(%arg0: i32, %arg1: memref<8x128xf32, #tpu.memory_space<vmem>>, %arg2: memref<1x128xf32, #tpu.memory_space<vmem>>, %arg3: memref<1x128xf32, #tpu.memory_space<vmem>>, %arg4: memref<8x128xf32, #tpu.memory_space<vmem>>) attributes {dimension_semantics = [#tpu.dimension_semantics<parallel>], iteration_bounds = array<i64: 2>, scalar_prefetch = 0 : i64, scratch_operands = 0 : i64, tpu.core_type = #tpu.core_type<tc>, window_params = [{transform_indices = @transform_0, window_bounds = array<i64: 8, 128>}, {pipeline_mode = #tpu.pipeline_mode<synchronous>, transform_indices = @transform_1, window_bounds = array<i64: 1, 128>}, {pipeline_mode = #tpu.pipeline_mode<synchronous>, transform_indices = @transform_2, window_bounds = array<i64: 1, 128>}, {transform_indices = @transform_3, window_bounds = array<i64: 8, 128>}]} {
    %c0 = arith.constant 0 : index
    %c0_0 = arith.constant 0 : index
    %0 = vector.load %arg1[%c0, %c0_0] : memref<8x128xf32, #tpu.memory_space<vmem>>, vector<8x128xf32>
    %1 = tpu.iota {dimensions = array<i32: 1>} : vector<8x128xi32>
    %c32_i32 = arith.constant 32 : i32
    %2 = vector.broadcast %c32_i32 : i32 to vector<8x128xi32>
    %3 = arith.cmpi slt, %1, %2 : vector<8x128xi32>
    %cst = arith.constant 0.000000e+00 : f32
    %4 = vector.broadcast %cst : f32 to vector<8x128xf32>
    %5 = arith.select %3, %0, %4 : vector<8x128xi1>, vector<8x128xf32>
    %cst_1 = arith.constant dense<0.000000e+00> : vector<8xf32>
    %6 = vector.multi_reduction <add>, %5, %cst_1 [1] : vector<8x128xf32> to vector<8xf32>
    %7 = vector.shape_cast %6 : vector<8xf32> to vector<8x1xf32>
    %cst_2 = arith.constant 3.125000e-02 : f32
    %8 = vector.broadcast %cst_2 : f32 to vector<8x1xf32>
    %9 = arith.mulf %7, %8 : vector<8x1xf32>
    %10 = vector.broadcast %9 : vector<8x1xf32> to vector<8x128xf32>
    %11 = arith.subf %0, %10 : vector<8x128xf32>
    %cst_3 = arith.constant 0.000000e+00 : f32
    %12 = vector.broadcast %cst_3 : f32 to vector<8x128xf32>
    %13 = arith.select %3, %11, %12 : vector<8x128xi1>, vector<8x128xf32>
    %14 = arith.mulf %13, %13 : vector<8x128xf32>
    %cst_4 = arith.constant dense<0.000000e+00> : vector<8xf32>
    %15 = vector.multi_reduction <add>, %14, %cst_4 [1] : vector<8x128xf32> to vector<8xf32>
    %16 = vector.shape_cast %15 : vector<8xf32> to vector<8x1xf32>
    %cst_5 = arith.constant 3.100000e+01 : f32
    %17 = vector.broadcast %cst_5 : f32 to vector<8x1xf32>
    %18 = arith.divf %16, %17 : vector<8x1xf32>
    %19 = math.sqrt %18 : vector<8x1xf32>
    %cst_6 = arith.constant 9.99999997E-7 : f32
    %20 = vector.broadcast %cst_6 : f32 to vector<8x1xf32>
    %21 = arith.addf %19, %20 : vector<8x1xf32>
    %cst_7 = arith.constant 1.000000e+00 : f32
    %22 = vector.broadcast %cst_7 : f32 to vector<8x1xf32>
    %23 = arith.divf %22, %21 : vector<8x1xf32>
    %c0_8 = arith.constant 0 : index
    %c0_9 = arith.constant 0 : index
    %24 = vector.load %arg2[%c0_8, %c0_9] : memref<1x128xf32, #tpu.memory_space<vmem>>, vector<1x128xf32>
    %c0_10 = arith.constant 0 : index
    %c0_11 = arith.constant 0 : index
    %25 = vector.load %arg3[%c0_10, %c0_11] : memref<1x128xf32, #tpu.memory_space<vmem>>, vector<1x128xf32>
    %26 = vector.broadcast %23 : vector<8x1xf32> to vector<8x128xf32>
    %27 = arith.mulf %11, %26 : vector<8x128xf32>
    %28 = vector.broadcast %24 : vector<1x128xf32> to vector<8x128xf32>
    %29 = arith.mulf %28, %27 : vector<8x128xf32>
    %30 = vector.broadcast %25 : vector<1x128xf32> to vector<8x128xf32>
    %31 = arith.addf %29, %30 : vector<8x128xf32>
    %c0_12 = arith.constant 0 : index
    %c0_13 = arith.constant 0 : index
    %32 = vector.load %arg4[%c0_12, %c0_13] : memref<8x128xf32, #tpu.memory_space<vmem>>, vector<8x128xf32>
    tpu.vector_store %arg4[%c0_12, %c0_13], %31 {strides = array<i32>} : memref<8x128xf32, #tpu.memory_space<vmem>>, vector<8x128xf32>,
    return
  }
  func.func @transform_0(%arg0: i32) -> (i32, i32) {
    %c0_i32 = arith.constant 0 : i32
    %c0_i32_0 = arith.constant 0 : i32
    return %arg0, %c0_i32 : i32, i32
  }
  func.func @transform_1(%arg0: i32) -> (i32, i32) {
    %c0_i32 = arith.constant 0 : i32
    %c0_i32_0 = arith.constant 0 : i32
    %c0_i32_1 = arith.constant 0 : i32
    return %c0_i32, %c0_i32_0 : i32, i32
  }
  func.func @transform_2(%arg0: i32) -> (i32, i32) {
    %c0_i32 = arith.constant 0 : i32
    %c0_i32_0 = arith.constant 0 : i32
    %c0_i32_1 = arith.constant 0 : i32
    return %c0_i32, %c0_i32_0 : i32, i32
  }
  func.func @transform_3(%arg0: i32) -> (i32, i32) {
    %c0_i32 = arith.constant 0 : i32
    %c0_i32_0 = arith.constant 0 : i32
    return %arg0, %c0_i32 : i32, i32
  }
}

</mosaic_0001>

<llo_original>
// kernel: tpu_custom_call.1
$region0: #{tpu_custom_call.1}
  #allocation0 [shape = 'u32[]', space=smem, size = 0x4, offset = 0x4, fixed_abs, tag = 'smem constant byte address 0x4 - core index']
  #allocation1 [shape = 'u32[72,128]{1,0:T(1,128)}', space=vmem, size = 0x9000, scoped, tag = 'internal scratch']
  %s0 = inlined_call_operand.hbm [shape: f32[16,128], index: 0, kind: input, shape index: {}]
  %s1 = inlined_call_operand.hbm [shape: f32[1,128], index: 1, kind: input, shape index: {}]
  %s2 = inlined_call_operand.vmem [shape: f32[1,128], index: 2, kind: input, shape index: {}]
  %s3 = inlined_call_operand.hbm [shape: f32[16,128], index: 3, kind: output, shape index: {}]
  %s4 = sld [smem:[#allocation0]]
  $region53: #{tpu_custom_call.1} parent=0
    _
  %s6 = ssub.s32 1, %s4
  %s7 = scalar_select 0, %s6, %s4
  $region1: #{tpu_custom_call.1} parent=0
    #allocation2 [shape = 'u8[8192]{0}', space=vmem, size = 0x2000, scoped, tag = 'input window, operand 0']
    #allocation3 [shape = 's32[2]{0}', space=sflag, size = 0x8, scoped, tag = 'scoped memory for tpu_custom_call.1']
    #allocation4 [shape = 's32[2]{0}', space=sflag, size = 0x8, scoped, tag = 'scoped memory for tpu_custom_call.1']
    #allocation5 [shape = 'u8[512]{0}', space=vmem, size = 0x400, scoped, tag = 'input window, operand 1, single buffered']
    #allocation6 [shape = 's32[1]{0}', space=sflag, size = 0x4, scoped, tag = 'scoped memory for tpu_custom_call.1']
    #allocation7 [shape = 'u8[8192]{0}', space=vmem, size = 0x2000, scoped, tag = 'output window, operand 0']
    %8 = vsyncpa [#allocation3], 0
    %s9 = scalar_lea.sflag [#allocation3], 1
    %10 = vsyncpa %s9, 0
    %11 = vsyncpa [#allocation6], 0
    %12 = vsyncpa [#allocation4], 0
    %s13 = scalar_lea.sflag [#allocation4], 1
    %14 = vsyncpa %s13, 0
    loop: start=0, step=1, limit=4
    $region2: #{tpu_custom_call.1} parent=1 // loop_pre_header
      _
    $region3: #{tpu_custom_call.1} parent=1 // loop_header
      %s16 = sphi 0, %s20
      %p17 = scmp.ge.s32.totalorder %s16, 4
      %s26 = sphi 0, %s28
      %s29 = sphi 0, %s26
      %s30 = sphi 0, %s29
      %s46 = sphi 0, %s30
      %s50 = sphi 0, %s50
      %s52 = sphi 0, %s50
      %s53 = sphi 0, %s52
      %s67 = sphi 0, %s53
      %s71 = sphi 0, %s71
      %s73 = sphi 0, %s71
      %s74 = sphi 0, %s73
      %s88 = sphi 0, %s74
      %s94 = sphi 0, %s96
      %s97 = sphi 0, %s94
      %s98 = sphi 0, %s97
      %s114 = sphi 0, %s98
    $region4: #{tpu_custom_call.1} parent=1 // loop_header_branch
      %19 = sbr.rel (%p17) target = $region8
    $region5: #{tpu_custom_call.1} parent=1 // loop_body
      %s21 = ssub.s32 %s16, 1
      %s22 = ssub.s32 %s16, 2
      %s23 = sadd.s32 %s16, 1
      %s24 = ssub.s32 %s16, %s23
      %p25 = scmp.eq.s32.totalorder %s24, 0
      %s27 = sadd.s32 %s26, 1
      %s28 = scalar_select %p25, %s26, %s27
      %p31 = pneg %p25
      %p32 = scmp.eq.s32.totalorder %s16, 1
      %p33 = por %p31, %p32
      %p34 = scmp.ne.s32.totalorder %s26, %s29
      %p35 = scmp.eq.s32.totalorder %s16, 0
      %p36 = por %p34, %p35
      %p37 = scmp.ne.s32.totalorder %s26, %s29
      %p38 = scmp.eq.s32.totalorder %s21, 1
      %p39 = por %p37, %p38
      %p40 = scmp.ne.s32.totalorder %s29, %s30
      %p41 = scmp.eq.s32.totalorder %s21, 0
      %p42 = por %p40, %p41
      %p43 = scmp.ne.s32.totalorder %s29, %s30
      %p44 = scmp.eq.s32.totalorder %s22, 1
      %p45 = por %p43, %p44
      %p47 = scmp.ne.s32.totalorder %s30, %s46
      %p48 = scmp.eq.s32.totalorder %s22, 0
      %p49 = por %p47, %p48
      %s51 = sadd.s32 %s50, 1
      %p54 = scmp.eq.s32.totalorder %s16, 1
      %p55 = scmp.ne.s32.totalorder %s50, %s52
      %p56 = scmp.eq.s32.totalorder %s16, 0
      %p57 = por %p55, %p56
      %p58 = scmp.ne.s32.totalorder %s50, %s52
      %p59 = scmp.eq.s32.totalorder %s21, 1
      %p60 = por %p58, %p59
      %p61 = scmp.ne.s32.totalorder %s52, %s53
      %p62 = scmp.eq.s32.totalorder %s21, 0
      %p63 = por %p61, %p62
      %p64 = scmp.ne.s32.totalorder %s52, %s53
      %p65 = scmp.eq.s32.totalorder %s22, 1
      %p66 = por %p64, %p65
      %p68 = scmp.ne.s32.totalorder %s53, %s67
      %p69 = scmp.eq.s32.totalorder %s22, 0
      %p70 = por %p68, %p69
      %s72 = sadd.s32 %s71, 1
      %p75 = scmp.eq.s32.totalorder %s16, 1
      %p76 = scmp.ne.s32.totalorder %s71, %s73
      %p77 = scmp.eq.s32.totalorder %s16, 0
      %p78 = por %p76, %p77
      %p79 = scmp.ne.s32.totalorder %s71, %s73
      %p80 = scmp.eq.s32.totalorder %s21, 1
      %p81 = por %p79, %p80
      %p82 = scmp.ne.s32.totalorder %s73, %s74
      %p83 = scmp.eq.s32.totalorder %s21, 0
      %p84 = por %p82, %p83
      %p85 = scmp.ne.s32.totalorder %s73, %s74
      %p86 = scmp.eq.s32.totalorder %s22, 1
      %p87 = por %p85, %p86
      %p89 = scmp.ne.s32.totalorder %s74, %s88
      %p90 = scmp.eq.s32.totalorder %s22, 0
      %p91 = por %p89, %p90
      %s92 = ssub.s32 %s16, %s23
      %p93 = scmp.eq.s32.totalorder %s92, 0
      %s95 = sadd.s32 %s94, 1
      %s96 = scalar_select %p93, %s94, %s95
      %p99 = pneg %p93
      %p100 = scmp.eq.s32.totalorder %s16, 1
      %p101 = por %p99, %p100
      %p102 = scmp.ne.s32.totalorder %s94, %s97
      %p103 = scmp.eq.s32.totalorder %s16, 0
      %p104 = por %p102, %p103
      %p105 = scmp.ne.s32.totalorder %s94, %s97
      %p106 = scmp.eq.s32.totalorder %s21, 1
      %p107 = por %p105, %p106
      %p108 = scmp.ne.s32.totalorder %s97, %s98
      %p109 = scmp.eq.s32.totalorder %s21, 0
      %p110 = por %p108, %p109
      %p111 = scmp.ne.s32.totalorder %s97, %s98
      %p112 = scmp.eq.s32.totalorder %s22, 1
      %p113 = por %p111, %p112
      %p115 = scmp.ne.s32.totalorder %s98, %s114
      %p116 = scmp.eq.s32.totalorder %s22, 0
      %p117 = por %p115, %p116
      %p118 = scmp.le.s32.totalorder 1, %s16
      %p119 = scmp.lt.s32.totalorder %s16, 3
      %p120 = pnand %p118, %p119
      %p121 = pneg %p120
      // Predicated region
      $region9: #{tpu_custom_call.1} parent=5 // pred_check
        _
      $region10: #{tpu_custom_call.1} parent=5 // pred_check_branch
        %123 = sbr.rel (%p120) target = $region12
      $region11: #{tpu_custom_call.1} parent=5 // pred_region
        %s124 = ssub.s32 %s16, 1
        // Predicated region
        $region13: #{tpu_custom_call.1} parent=11 // pred_check
          %p125 = pneg %p63
        $region14: #{tpu_custom_call.1} parent=11 // pred_check_branch
          %127 = sbr.rel (%p125) target = $region16
        $region15: #{tpu_custom_call.1} parent=11 // pred_region
          %129 = vsyncadd [#allocation6], 0
          %s131 = sshll.u32 %s1, 4
          %s132 = int_to_ptr.hbm [resolvable:$true] %s131
          %s133 = sshll.u32 [#allocation5], 4
          %s134 = int_to_ptr.vmem [resolvable:$true] %s133
          %136 = dma.hbm_to_vmem [thread:$0]  %s132, 16, %s134, [#allocation6]
        $region16: #{tpu_custom_call.1} parent=11 // pred_fallthru
          _
        // Predicated region
        $region17: #{tpu_custom_call.1} parent=11 // pred_check
          %p137 = pneg %p84
        $region18: #{tpu_custom_call.1} parent=11 // pred_check_branch
          %139 = sbr.rel (%p137) target = $region20
        $region19: #{tpu_custom_call.1} parent=11 // pred_region
          _
        $region20: #{tpu_custom_call.1} parent=11 // pred_fallthru
          _
      $region12: #{tpu_custom_call.1} parent=5 // pred_fallthru
        _
      %p140 = scmp.lt.s32.totalorder %s16, 2
      // Predicated region
      $region21: #{tpu_custom_call.1} parent=5 // pred_check
        %p141 = pneg %p140
      $region22: #{tpu_custom_call.1} parent=5 // pred_check_branch
        %143 = sbr.rel (%p141) target = $region24
      $region23: #{tpu_custom_call.1} parent=5 // pred_region
        // Predicated region
        $region25: #{tpu_custom_call.1} parent=23 // pred_check
          %p144 = pneg %p36
        $region26: #{tpu_custom_call.1} parent=23 // pred_check_branch
          %146 = sbr.rel (%p144) target = $region28
        $region27: #{tpu_custom_call.1} parent=23 // pred_region
          %s147 = sand.u32 %s26, 1
          %s148 = scalar_lea.sflag [#allocation3], %s147
          %s149 = sand.u32 %s26, 1
          %s150 = smul.addr %s149, 8
          %s151 = scalar_lea.vmem [#allocation2], %s150
          %153 = vsyncadd %s148, 0
          %s154 = smul.addr %s16, 8
          %s155 = scalar_lea.hbm %s0, %s154
          %s157 = sshll.u32 %s155, 4
          %s158 = int_to_ptr.hbm [resolvable:$true] %s157
          %s159 = sshll.u32 %s151, 4
          %s160 = int_to_ptr.vmem [resolvable:$true] %s159
          %162 = dma.hbm_to_vmem [thread:$0]  %s158, 128, %s160, %s148
        $region28: #{tpu_custom_call.1} parent=23 // pred_fallthru
          _
      $region24: #{tpu_custom_call.1} parent=5 // pred_fallthru
        _
      %p163 = scmp.le.s32.totalorder 1, %s16
      %p164 = scmp.lt.s32.totalorder %s16, 3
      %p165 = pnand %p163, %p164
      %p166 = pneg %p165
      // Predicated region
      $region29: #{tpu_custom_call.1} parent=5 // pred_check
        _
      $region30: #{tpu_custom_call.1} parent=5 // pred_check_branch
        %168 = sbr.rel (%p165) target = $region32
      $region31: #{tpu_custom_call.1} parent=5 // pred_region
        %s169 = ssub.s32 %s16, 1
        %s170 = sand.u32 %s29, 1
        %s171 = scalar_lea.sflag [#allocation3], %s170
        %s172 = sand.u32 %s29, 1
        %s173 = smul.addr %s172, 8
        %s174 = scalar_lea.vmem [#allocation2], %s173
        // Predicated region
        $region33: #{tpu_custom_call.1} parent=31 // pred_check
          %p175 = pneg %p42
        $region34: #{tpu_custom_call.1} parent=31 // pred_check_branch
          %177 = sbr.rel (%p175) target = $region36
        $region35: #{tpu_custom_call.1} parent=31 // pred_region
          %179 = dma.done %s171, 128
        $region36: #{tpu_custom_call.1} parent=31 // pred_fallthru
          _
        // Predicated region
        $region37: #{tpu_custom_call.1} parent=31 // pred_check
          %p180 = pneg %p63
        $region38: #{tpu_custom_call.1} parent=31 // pred_check_branch
          %182 = sbr.rel (%p180) target = $region40
        $region39: #{tpu_custom_call.1} parent=31 // pred_region
          %184 = dma.done [#allocation6], 16
        $region40: #{tpu_custom_call.1} parent=31 // pred_fallthru
          _
        %s185 = sand.u32 %s29, 1
        %s186 = scalar_lea.sflag [#allocation3], %s185
        %s187 = sand.u32 %s29, 1
        %s188 = smul.addr %s187, 8
        %s189 = scalar_lea.vmem [#allocation2], %s188
        %p190 = pneg %p42
        %p191 = pneg %p39
        %p192 = pneg %p63
        %p193 = pneg %p60
        %p194 = pneg %p84
        %p195 = pneg %p81
        %p196 = pneg %p110
        %p197 = pneg %p107
        %s198 = sand.u32 %s97, 1
        %s199 = scalar_lea.sflag [#allocation4], %s198
        %s200 = sand.u32 %s97, 1
        %s201 = smul.addr %s200, 8
        %s202 = scalar_lea.vmem [#allocation7], %s201
        %v203 = vld [vmem:[%s174] sm:$0xff]
        %v204 = vlaneseq
        %v205 = vand.u32 %v204, 127
        %vm206 = vcmp.lt.s32.totalorder %v205, 32
        %v207 = vsel %vm206, %v203, 0.0
        %208 = vadd.xlane.f32.xlu0 %v207
        %v209 = vpop.xlane.xlu0 %208
        %v210 = vmul.f32 %v209, 0.03125
        %v211 = vsub.f32 %v203, %v210
        %v212 = vsel %vm206, %v211, 0.0
        %v213 = vmul.f32 %v212, %v212
        %214 = vadd.xlane.f32.xlu0 %v213
        %v215 = vpop.xlane.xlu0 %214
        %v216 = vrcp.pop 31.0
        %v217 = vmul.f32 31.0, %v216
        %v218 = vsub.f32 1.0, %v217
        %v219 = vmul.f32 %v216, %v218
        %v220 = vadd.f32 %v216, %v219
        %vm221 = vweird.f32 %v216
        %v222 = vsel %vm221, %v216, %v220
        %v223 = vmul.f32 %v215, %v222
        %v224 = vrsqrt.pop %v223
        %v225 = vmul.f32 %v224, %v223
        %v226 = vmul.f32 %v225, %v224
        %v227 = vmul.f32 0.5, %v226
        %v228 = vsub.f32 1.5, %v227
        %v229 = vmul.f32 %v224, %v228
        %v230 = vmul.f32 %v223, %v229
        %vm231 = vcmp.eq.f32.partialorder %v223, inf
        %v232 = vsel %vm231, %v223, %v230
        %vm233 = vcmp.eq.f32.partialorder %v223, 0.0
        %v234 = vand.u32 %v223, 2147483648
        %v235 = vsel %vm233, %v234, %v232
        %v236 = vadd.f32 %v235, 1e-06
        %v237 = vrcp.pop %v236
        %v238 = vmul.f32 %v236, %v237
        %v239 = vsub.f32 1.0, %v238
        %v240 = vmul.f32 %v237, %v239
        %v241 = vadd.f32 %v237, %v240
        %vm242 = vweird.f32 %v236
        %vm243 = vweird.f32 %v237
        %vm244 = vmor %vm242, %vm243
        %v245 = vsel %vm244, %v237, %v241
        %v246 = vand.u32 2147483647, %v236
        %vm247 = vcmp.eq.f32.partialorder %v246, 8.507059e+37
        %v248 = vand.u32 %v236, 2147483648
        %v249 = vor.u32 1.1754944e-38, %v248
        %v250 = vsel %vm247, %v249, %v245
        %v251 = vmul.f32 1.0, %v250
        %v252 = vld [vmem:[#allocation5] sm:$0x1]
        %v253 = vld [vmem:[%s2] sm:$0x1]
        %v254 = vmul.f32 %v211, %v251
        %v256 = vperm.slane %v252, 0
        %v258 = vmul.f32 %v256, %v254
        %v260 = vperm.slane %v253, 0
        %v262 = vadd.f32 %v258, %v260
        %263 = vst [vmem:[%s202] sm:$0xff] %v262
        %s264 = sand.u32 %s97, 1
        %s265 = scalar_lea.sflag [#allocation4], %s264
        %s266 = sand.u32 %s97, 1
        %s267 = smul.addr %s266, 8
        %s268 = scalar_lea.vmem [#allocation7], %s267
        // Predicated region
        $region41: #{tpu_custom_call.1} parent=31 // pred_check
          %p269 = pneg %p107
        $region42: #{tpu_custom_call.1} parent=31 // pred_check_branch
          %271 = sbr.rel (%p269) target = $region44
        $region43: #{tpu_custom_call.1} parent=31 // pred_region
          %273 = vsyncadd %s265, 0
          %s274 = smul.addr %s21, 8
          %s275 = scalar_lea.hbm %s3, %s274
          %s277 = sshll.u32 %s268, 4
          %s278 = int_to_ptr.vmem [resolvable:$true] %s277
          %s279 = sshll.u32 %s275, 4
          %s280 = int_to_ptr.hbm [resolvable:$true] %s279
          %282 = dma.vmem_to_hbm [thread:$0]  %s278, 128, %s280, %s265
        $region44: #{tpu_custom_call.1} parent=31 // pred_fallthru
          _
      $region32: #{tpu_custom_call.1} parent=5 // pred_fallthru
        _
      %p283 = scmp.le.s32.totalorder 2, %s16
      // Predicated region
      $region45: #{tpu_custom_call.1} parent=5 // pred_check
        %p284 = pneg %p283
      $region46: #{tpu_custom_call.1} parent=5 // pred_check_branch
        %286 = sbr.rel (%p284) target = $region48
      $region47: #{tpu_custom_call.1} parent=5 // pred_region
        %s287 = ssub.s32 %s16, 2
        // Predicated region
        $region49: #{tpu_custom_call.1} parent=47 // pred_check
          %p288 = pneg %p113
        $region50: #{tpu_custom_call.1} parent=47 // pred_check_branch
          %290 = sbr.rel (%p288) target = $region52
        $region51: #{tpu_custom_call.1} parent=47 // pred_region
          %s291 = sand.u32 %s98, 1
          %s292 = scalar_lea.sflag [#allocation4], %s291
          %s293 = sand.u32 %s98, 1
          %s294 = smul.addr %s293, 8
          %s295 = scalar_lea.vmem [#allocation7], %s294
          %297 = dma.done %s292, 128
        $region52: #{tpu_custom_call.1} parent=47 // pred_fallthru
          _
      $region48: #{tpu_custom_call.1} parent=5 // pred_fallthru
        _
    $region6: #{tpu_custom_call.1} parent=1 // loop_footer
      %s20 = sadd.s32 1, %s16
    $region7: #{tpu_custom_call.1} parent=1 // loop_footer_branch
      %15 = sbr.rel target = $region3
    $region8: #{tpu_custom_call.1} parent=1 // loop_exit
      _
    %298 = vsyncpa [#allocation3], 1
    %s299 = scalar_lea.sflag [#allocation3], 1
    %300 = vsyncpa %s299, 1
    %301 = vsyncpa [#allocation6], 1
    %302 = vsyncpa [#allocation4], 1
    %s303 = scalar_lea.sflag [#allocation4], 1
    %304 = vsyncpa %s303, 1

</llo_original>
